<compile_context>
chip_gen: v6e
topology: v6e:2x2x1
jax: 0.10.0
libtpu: 0.0.40
codegen_flags: <defaults>
</compile_context>

<pallas_src>
import functools

import jax
import jax.numpy as jnp
from jax.experimental import pallas as pl
from jax.experimental.pallas import tpu as pltpu


def _time_avg_encoder_kernel(x_ref, w_ref, b_ref, o_ref, acc_ref,
                             *, n, tile_t, inv_t):
    """Grid = (D_out tiles [parallel], time tiles [arbitrary reduction]).

    x_ref:   (N, TILE_T, D_in)      bf16  current slab of TILE_T frames
    w_ref:   (D_in, TILE_DOUT)      bf16  resident weight tile
    b_ref:   (1, TILE_DOUT)         f32   resident bias tile
    o_ref:   (N, TILE_DOUT)         f32   output tile (same block across T)
    acc_ref: (N, TILE_DOUT)         f32   scratch accumulator
    """
    t = pl.program_id(1)

    @pl.when(t == 0)
    def _init():
        acc_ref[...] = jnp.zeros_like(acc_ref)

    # Merge batch and time into the matmul M dimension: (N*TILE_T, D_in).
    x = x_ref[...].reshape(n * tile_t, -1)
    h = jnp.dot(x, w_ref[...], preferred_element_type=jnp.float32)
    h = jnp.maximum(h + b_ref[...], 0.0)          # per-frame Linear+bias+ReLU
    # Partial temporal sum of this tile's TILE_T frames, per batch element.
    acc_ref[...] += h.reshape(n, tile_t, -1).sum(axis=1)

    @pl.when(t == pl.num_programs(1) - 1)
    def _finalize():
        o_ref[...] = (acc_ref[...] * inv_t).astype(o_ref.dtype)   # mean over T


def time_average_encoder(x, w, b, *, tile_t=None, tile_dout=128):
    """x: (N, T, C, H, W) f32; w: (D_in, D_out); b: (D_out,). Returns (N, D_out)."""
    N, T, C, H, W = x.shape
    D_in = C * H * W
    D_out = w.shape[1]

    # Natural layout — no HBM transpose. Each grid step DMAs a contiguous
    # (N, TILE_T, D_in) slab.
    x_flat = x.reshape(N, T, D_in)

    # bf16 matmul operands; accumulation stays f32 inside the kernel.
    x_bf = x_flat.astype(jnp.bfloat16)
    w_bf = w.astype(jnp.bfloat16)

    # Lane-dense output: pad D_out up to a multiple of 128 (zero columns are
    # sliced off after the call; relu(0 + 0) = 0, so padding is inert).
    d_out_pad = ((D_out + tile_dout - 1) // tile_dout) * tile_dout
    if d_out_pad != D_out:
        w_bf = jnp.pad(w_bf, ((0, 0), (0, d_out_pad - D_out)))
        b = jnp.pad(b, ((0, d_out_pad - D_out),))
    b2 = b.reshape(1, d_out_pad).astype(jnp.float32)

    # Time tiling: batch TILE_T frames per grid step (sublane-aligned when
    # possible); fall back to the whole T axis in one step.
    if tile_t is None:
        tile_t = next((c for c in (32, 24, 16, 8) if T % c == 0), T)
    assert T % tile_t == 0
    n_t = T // tile_t
    n_j = d_out_pad // tile_dout

    # VMEM budget (fits v7x's 64 MiB physical / 32 MiB default scoped):
    # double-buffered x slab + double-buffered w/b tiles + output + accumulator.
    x_blk = N * tile_t * D_in * 2
    w_blk = D_in * tile_dout * 2
    b_blk = tile_dout * 4
    o_blk = N * tile_dout * 4
    acc_blk = N * tile_dout * 4
    vmem_limit = int(min(
        64 * 1024 * 1024,
        max(4 * 1024 * 1024, 4 * (x_blk + w_blk + b_blk + o_blk + acc_blk)),
    ))

    cost = pl.CostEstimate(
        flops=2 * N * T * D_in * d_out_pad,
        transcendentals=0,
        bytes_accessed=int(x_bf.size * 2 + w_bf.size * 2
                           + b2.size * 4 + N * d_out_pad * 4),
    )

    kernel = functools.partial(
        _time_avg_encoder_kernel, n=N, tile_t=tile_t, inv_t=1.0 / T)

    out = pl.pallas_call(
        kernel,
        out_shape=jax.ShapeDtypeStruct((N, d_out_pad), jnp.float32),
        grid_spec=pltpu.PrefetchScalarGridSpec(
            num_scalar_prefetch=0,
            grid=(n_j, n_t),
            in_specs=[
                # Streamed activations (block index advances along T).
                pl.BlockSpec((N, tile_t, D_in), lambda j, t: (0, t, 0)),
                # Resident weight/bias tiles (block index constant along T).
                pl.BlockSpec((D_in, tile_dout), lambda j, t: (0, j)),
                pl.BlockSpec((1, tile_dout), lambda j, t: (0, j)),
            ],
            out_specs=pl.BlockSpec((N, tile_dout), lambda j, t: (0, j)),
            scratch_shapes=[pltpu.VMEM((N, tile_dout), jnp.float32)],
        ),
        compiler_params=pltpu.CompilerParams(
            # D_out tiles are independent (megacore-parallel on v7x);
            # T is the sequential reduction axis carrying the accumulator.
            dimension_semantics=("parallel", "arbitrary"),
            vmem_limit_bytes=vmem_limit,
        ),
        cost_estimate=cost,
    )(x_bf, w_bf, b2)

    return out[:, :D_out].astype(x.dtype)


def _reference(x, w, b, matmul_dtype=jnp.float32):
    """Pure-JAX reference mirroring the PyTorch forward semantics.

    matmul_dtype=bfloat16 reproduces the kernel's matmul-operand precision
    (accumulation stays f32), matching how the Pallas kernel computes.
    """
    N, T, C, H, W = x.shape
    x_flat = x.reshape(N * T, C * H * W).astype(matmul_dtype)
    feat = jnp.dot(x_flat, w.astype(matmul_dtype),
                   preferred_element_type=jnp.float32)
    feat = jnp.maximum(feat + b.astype(jnp.float32), 0.0)   # Linear -> ReLU
    feat = feat.reshape(N, T, -1)                            # (N, T, F)
    return feat.mean(axis=1)                                 # avg over T


if __name__ == "__main__":
    key = jax.random.PRNGKey(0)
    k_x, k_w, k_b = jax.random.split(key, 3)

    # Small shapes consistent with the module's (N, T, C, H, W) input.
    N, T, C, H, W = 2, 8, 4, 8, 8
    D_in = C * H * W          # 256
    D_out = 32

    x = jax.random.normal(k_x, (N, T, C, H, W), dtype=jnp.float32)
    w = jax.random.normal(k_w, (D_in, D_out), dtype=jnp.float32) * (2.0 / D_in) ** 0.5
    b = jax.random.normal(k_b, (D_out,), dtype=jnp.float32) * 0.01

    out = jax.block_until_ready(time_average_encoder(x, w, b))
    assert out.shape == (N, D_out)

    # Tight check against a reference matching the kernel's bf16 matmul-operand
    # precision (verifies the kernel logic itself).
    ref_bf16 = _reference(x, w, b, matmul_dtype=jnp.bfloat16)
    assert jnp.allclose(out, ref_bf16, atol=1e-3, rtol=1e-3)

    # Loose check against the full-f32 reference (bf16 input-precision
    # deviation only — not a kernel bug).
    ref_f32 = _reference(x, w, b)
    assert jnp.allclose(out, ref_f32, atol=5e-2, rtol=5e-2)

    print("KERNEL_OK")
</pallas_src>

<mosaic_0001>
module attributes {stable_mosaic.version = 11 : i64} {
  func.func @_time_avg_encoder_kernel(%arg0: i32, %arg1: i32, %arg2: memref<2x8x256xbf16, #tpu.memory_space<vmem>>, %arg3: memref<256x128xbf16, #tpu.memory_space<vmem>>, %arg4: memref<1x128xf32, #tpu.memory_space<vmem>>, %arg5: memref<2x128xf32, #tpu.memory_space<vmem>>, %arg6: memref<2x128xf32, #tpu.memory_space<vmem>>) attributes {dimension_semantics = [#tpu.dimension_semantics<parallel>, #tpu.dimension_semantics<arbitrary>], iteration_bounds = array<i64: 1, 1>, scalar_prefetch = 0 : i64, scratch_operands = 1 : i64, tpu.core_type = #tpu.core_type<tc>, window_params = [{transform_indices = @transform_0, window_bounds = array<i64: 2, 8, 256>}, {transform_indices = @transform_1, window_bounds = array<i64: 256, 128>}, {transform_indices = @transform_2, window_bounds = array<i64: 1, 128>}, {transform_indices = @transform_3, window_bounds = array<i64: 2, 128>}]} {
    %c0_i32 = arith.constant 0 : i32
    %0 = arith.cmpi eq, %arg1, %c0_i32 : i32
    %1 = arith.extui %0 : i1 to i32
    %c0_i32_0 = arith.constant 0 : i32
    %2 = arith.cmpi ne, %1, %c0_i32_0 : i32
    scf.if %2 {
      %cst_15 = arith.constant 0.000000e+00 : f32
      %20 = vector.broadcast %cst_15 : f32 to vector<2x128xf32>
      %c0_16 = arith.constant 0 : index
      %c0_17 = arith.constant 0 : index
      %21 = vector.load %arg6[%c0_16, %c0_17] : memref<2x128xf32, #tpu.memory_space<vmem>>, vector<2x128xf32>
      tpu.vector_store %arg6[%c0_16, %c0_17], %20 {strides = array<i32>} : memref<2x128xf32, #tpu.memory_space<vmem>>, vector<2x128xf32>,
    } else {
    }
    %c0 = arith.constant 0 : index
    %c0_1 = arith.constant 0 : index
    %c0_2 = arith.constant 0 : index
    %3 = vector.load %arg2[%c0, %c0_1, %c0_2] : memref<2x8x256xbf16, #tpu.memory_space<vmem>>, vector<2x8x256xbf16>
    %4 = vector.shape_cast %3 : vector<2x8x256xbf16> to vector<16x256xbf16>
    %c0_3 = arith.constant 0 : index
    %c0_4 = arith.constant 0 : index
    %5 = vector.load %arg3[%c0_3, %c0_4] : memref<256x128xbf16, #tpu.memory_space<vmem>>, vector<256x128xbf16>
    %cst = arith.constant dense<0.000000e+00> : vector<16x128xf32>
    %6 = tpu.matmul %4, %5, %cst {dimension_numbers = #tpu.dot_dimension_numbers<[1], [0], [0], [1], [0, 0, 1, 1], [], []>} : vector<16x256xbf16>, vector<256x128xbf16>, vector<16x128xf32> -> vector<16x128xf32>
    %c0_5 = arith.constant 0 : index
    %c0_6 = arith.constant 0 : index
    %7 = vector.load %arg4[%c0_5, %c0_6] : memref<1x128xf32, #tpu.memory_space<vmem>>, vector<1x128xf32>
    %8 = vector.broadcast %7 : vector<1x128xf32> to vector<16x128xf32>
    %9 = arith.addf %6, %8 : vector<16x128xf32>
    %cst_7 = arith.constant 0.000000e+00 : f32
    %10 = vector.broadcast %cst_7 : f32 to vector<16x128xf32>
    %11 = arith.maximumf %9, %10 : vector<16x128xf32>
    %c0_8 = arith.constant 0 : index
    %c0_9 = arith.constant 0 : index
    %12 = vector.load %arg6[%c0_8, %c0_9] : memref<2x128xf32, #tpu.memory_space<vmem>>, vector<2x128xf32>
    %13 = vector.shape_cast %11 : vector<16x128xf32> to vector<2x8x128xf32>
    %cst_10 = arith.constant dense<0.000000e+00> : vector<2x128xf32>
    %14 = vector.multi_reduction <add>, %13, %cst_10 [1] : vector<2x8x128xf32> to vector<2x128xf32>
    %15 = arith.addf %12, %14 : vector<2x128xf32>
    %c0_11 = arith.constant 0 : index
    %c0_12 = arith.constant 0 : index
    %16 = vector.load %arg6[%c0_11, %c0_12] : memref<2x128xf32, #tpu.memory_space<vmem>>, vector<2x128xf32>
    tpu.vector_store %arg6[%c0_11, %c0_12], %15 {strides = array<i32>} : memref<2x128xf32, #tpu.memory_space<vmem>>, vector<2x128xf32>,
    %c0_i32_13 = arith.constant 0 : i32
    %17 = arith.cmpi eq, %arg1, %c0_i32_13 : i32
    %18 = arith.extui %17 : i1 to i32
    %c0_i32_14 = arith.constant 0 : i32
    %19 = arith.cmpi ne, %18, %c0_i32_14 : i32
    scf.if %19 {
      %c0_15 = arith.constant 0 : index
      %c0_16 = arith.constant 0 : index
      %20 = vector.load %arg6[%c0_15, %c0_16] : memref<2x128xf32, #tpu.memory_space<vmem>>, vector<2x128xf32>
      %cst_17 = arith.constant 1.250000e-01 : f32
      %21 = vector.broadcast %cst_17 : f32 to vector<2x128xf32>
      %22 = arith.mulf %20, %21 : vector<2x128xf32>
      %c0_18 = arith.constant 0 : index
      %c0_19 = arith.constant 0 : index
      %23 = vector.load %arg5[%c0_18, %c0_19] : memref<2x128xf32, #tpu.memory_space<vmem>>, vector<2x128xf32>
      tpu.vector_store %arg5[%c0_18, %c0_19], %22 {strides = array<i32>} : memref<2x128xf32, #tpu.memory_space<vmem>>, vector<2x128xf32>,
    } else {
    }
    return
  }
  func.func @transform_0(%arg0: i32, %arg1: i32) -> (i32, i32, i32) {
    %c0_i32 = arith.constant 0 : i32
    %c0_i32_0 = arith.constant 0 : i32
    %c0_i32_1 = arith.constant 0 : i32
    return %c0_i32, %arg1, %c0_i32_0 : i32, i32, i32
  }
  func.func @transform_1(%arg0: i32, %arg1: i32) -> (i32, i32) {
    %c0_i32 = arith.constant 0 : i32
    %c0_i32_0 = arith.constant 0 : i32
    return %c0_i32, %arg0 : i32, i32
  }
  func.func @transform_2(%arg0: i32, %arg1: i32) -> (i32, i32) {
    %c0_i32 = arith.constant 0 : i32
    %c0_i32_0 = arith.constant 0 : i32
    return %c0_i32, %arg0 : i32, i32
  }
  func.func @transform_3(%arg0: i32, %arg1: i32) -> (i32, i32) {
    %c0_i32 = arith.constant 0 : i32
    %c0_i32_0 = arith.constant 0 : i32
    return %c0_i32, %arg0 : i32, i32
  }
}

</mosaic_0001>

<llo_original>
// kernel: tpu_custom_call.1
$region0: #{tpu_custom_call.1}
  #allocation0 [shape = 'u32[]', space=smem, size = 0x4, offset = 0x4, fixed_abs, tag = 'smem constant byte address 0x4 - core index']
  #allocation1 [shape = 'u32[144,128]{1,0:T(1,128)}', space=vmem, size = 0x12000, scoped, tag = 'internal scratch']
  #allocation2 [shape = 'f32[2,128]{1,0:T(2,128)}', space=vmem, size = 0x400, scoped, tag = 'scratch operand']
  %s0 = inlined_call_operand.hbm [shape: bf16[2,8,256], index: 0, kind: input, shape index: {}]
  %s1 = inlined_call_operand.hbm [shape: bf16[256,128], index: 1, kind: input, shape index: {}]
  %s2 = inlined_call_operand.vmem [shape: f32[1,128], index: 2, kind: input, shape index: {}]
  %s3 = inlined_call_operand.hbm [shape: f32[2,128], index: 3, kind: output, shape index: {}]
  %s4 = sld [smem:[#allocation0]]
  $region38: #{tpu_custom_call.1} parent=0
    _
  %s6 = ssub.s32 1, %s4
  %s7 = scalar_select 0, %s6, %s4
  $region1: #{tpu_custom_call.1} parent=0
    #allocation3 [shape = 'u8[8192]{0}', space=vmem, size = 0x2000, scoped, tag = 'input window, operand 0, single buffered']
    #allocation4 [shape = 's32[1]{0}', space=sflag, size = 0x4, scoped, tag = 'scoped memory for tpu_custom_call.1']
    #allocation5 [shape = 's32[1]{0}', space=sflag, size = 0x4, scoped, tag = 'scoped memory for tpu_custom_call.1']
    #allocation6 [shape = 'u8[65536]{0}', space=vmem, size = 0x10000, scoped, tag = 'input window, operand 1, single buffered']
    #allocation7 [shape = 's32[1]{0}', space=sflag, size = 0x4, scoped, tag = 'scoped memory for tpu_custom_call.1']
    #allocation8 [shape = 'u8[1024]{0}', space=vmem, size = 0x400, scoped, tag = 'output window, operand 0, single buffered']
    %8 = vsyncpa [#allocation4], 0
    %9 = vsyncpa [#allocation7], 0
    %10 = vsyncpa [#allocation5], 0
    // Predicated region
    $region2: #{tpu_custom_call.1} parent=1 // pred_check
      _
    $region3: #{tpu_custom_call.1} parent=1 // pred_check_branch
      %12 = sbr.rel (0) target = $region5
    $region4: #{tpu_custom_call.1} parent=1 // pred_region
      %s14 = ssub.s32 256, 256
      %15 = vsyncadd [#allocation4], %s14
      %s16 = sshll.u32 [#allocation3], 4
      %s17 = int_to_ptr.vmem [resolvable:$true] %s16
      %22 = dma.hbm_to_vmem [thread:$0]  %s0, 256, %s17, [#allocation4], 128, 128, 8
    $region5: #{tpu_custom_call.1} parent=1 // pred_fallthru
      _
    // Predicated region
    $region6: #{tpu_custom_call.1} parent=1 // pred_check
      _
    $region7: #{tpu_custom_call.1} parent=1 // pred_check_branch
      %24 = sbr.rel (0) target = $region9
    $region8: #{tpu_custom_call.1} parent=1 // pred_region
      %s26 = ssub.s32 2048, 2048
      %27 = vsyncadd [#allocation7], %s26
      %s28 = sshll.u32 [#allocation6], 4
      %s29 = int_to_ptr.vmem [resolvable:$true] %s28
      %34 = dma.hbm_to_vmem [thread:$0]  %s1, 2048, %s29, [#allocation7], 64, 64, 4
    $region9: #{tpu_custom_call.1} parent=1 // pred_fallthru
      _
    // Predicated region
    $region10: #{tpu_custom_call.1} parent=1 // pred_check
      _
    $region11: #{tpu_custom_call.1} parent=1 // pred_check_branch
      %36 = sbr.rel (0) target = $region13
    $region12: #{tpu_custom_call.1} parent=1 // pred_region
      _
    $region13: #{tpu_custom_call.1} parent=1 // pred_fallthru
      _
    // Predicated region
    $region14: #{tpu_custom_call.1} parent=1 // pred_check
      _
    $region15: #{tpu_custom_call.1} parent=1 // pred_check_branch
      %38 = sbr.rel (0) target = $region17
    $region16: #{tpu_custom_call.1} parent=1 // pred_region
      %39 = dma.done [#allocation4], 256
    $region17: #{tpu_custom_call.1} parent=1 // pred_fallthru
      _
    // Predicated region
    $region18: #{tpu_custom_call.1} parent=1 // pred_check
      _
    $region19: #{tpu_custom_call.1} parent=1 // pred_check_branch
      %41 = sbr.rel (0) target = $region21
    $region20: #{tpu_custom_call.1} parent=1 // pred_region
      %42 = dma.done [#allocation7], 2048
    $region21: #{tpu_custom_call.1} parent=1 // pred_fallthru
      _
    %p44 = scmp.eq.s32.totalorder 0, 0
    // Predicated region
    $region22: #{tpu_custom_call.1} parent=1 // pred_check
      %p45 = pneg %p44
    $region23: #{tpu_custom_call.1} parent=1 // pred_check_branch
      %47 = sbr.rel (%p45) target = $region25
    $region24: #{tpu_custom_call.1} parent=1 // pred_region
      %48 = vst [vmem:[#allocation2] sm:$0x3] 0.0
    $region25: #{tpu_custom_call.1} parent=1 // pred_fallthru
      _
    %v49 = vld [vmem:[#allocation3] sm:$0xff]
    %v50 = vld [vmem:[#allocation3 + $0x8] sm:$0xff]
    %v51 = vld [vmem:[#allocation6] sm:$0xf]
    %v52 = vld [vmem:[#allocation6 + $0x4] sm:$0xf]
    %v53 = vld [vmem:[#allocation6 + $0x8] sm:$0xf]
    %v54 = vld [vmem:[#allocation6 + $0xc] sm:$0xf]
    %v55 = vld [vmem:[#allocation6 + $0x10] sm:$0xf]
    %v56 = vld [vmem:[#allocation6 + $0x14] sm:$0xf]
    %v57 = vld [vmem:[#allocation6 + $0x18] sm:$0xf]
    %v58 = vld [vmem:[#allocation6 + $0x1c] sm:$0xf]
    %v59 = vld [vmem:[#allocation6 + $0x20] sm:$0xf]
    %v60 = vld [vmem:[#allocation6 + $0x24] sm:$0xf]
    %v61 = vld [vmem:[#allocation6 + $0x28] sm:$0xf]
    %v62 = vld [vmem:[#allocation6 + $0x2c] sm:$0xf]
    %v63 = vld [vmem:[#allocation6 + $0x30] sm:$0xf]
    %v64 = vld [vmem:[#allocation6 + $0x34] sm:$0xf]
    %v65 = vld [vmem:[#allocation6 + $0x38] sm:$0xf]
    %v66 = vld [vmem:[#allocation6 + $0x3c] sm:$0xf]
    %v67 = vld [vmem:[#allocation6 + $0x40] sm:$0xf]
    %v68 = vld [vmem:[#allocation6 + $0x44] sm:$0xf]
    %v69 = vld [vmem:[#allocation6 + $0x48] sm:$0xf]
    %v70 = vld [vmem:[#allocation6 + $0x4c] sm:$0xf]
    %v71 = vld [vmem:[#allocation6 + $0x50] sm:$0xf]
    %v72 = vld [vmem:[#allocation6 + $0x54] sm:$0xf]
    %v73 = vld [vmem:[#allocation6 + $0x58] sm:$0xf]
    %v74 = vld [vmem:[#allocation6 + $0x5c] sm:$0xf]
    %v75 = vld [vmem:[#allocation6 + $0x60] sm:$0xf]
    %v76 = vld [vmem:[#allocation6 + $0x64] sm:$0xf]
    %v77 = vld [vmem:[#allocation6 + $0x68] sm:$0xf]
    %v78 = vld [vmem:[#allocation6 + $0x6c] sm:$0xf]
    %v79 = vld [vmem:[#allocation6 + $0x70] sm:$0xf]
    %v80 = vld [vmem:[#allocation6 + $0x74] sm:$0xf]
    %v81 = vld [vmem:[#allocation6 + $0x78] sm:$0xf]
    %v82 = vld [vmem:[#allocation6 + $0x7c] sm:$0xf]
    %v83 = vld [vmem:[%s2] sm:$0x1]
    %v85 = vlaneseq
    %v86 = vshrl.u32 %v85, 7
    %v87 = vsub.s32 0, %v86
    %v88 = vrot.slane %v83, %v87
    %v92 = vunpack.c.l.b16 %v49
    %v93 = vunpack.c.h.b16 %v49
    %v94 = vunpack.c.l.b16 %v50
    %v95 = vunpack.c.h.b16 %v50
    %v96 = vpack.c.b16 %v94, %v92
    %v97 = vpack.c.b16 %v95, %v93
    %v132 = vunpack.c.l.b16 %v51
    %v133 = vunpack.c.l.b16 %v52
    %v134 = vunpack.c.l.b16 %v53
    %v135 = vunpack.c.l.b16 %v54
    %v136 = vunpack.c.l.b16 %v55
    %v137 = vunpack.c.l.b16 %v56
    %v138 = vunpack.c.l.b16 %v57
    %v139 = vunpack.c.l.b16 %v58
    %v140 = vunpack.c.l.b16 %v59
    %v141 = vunpack.c.l.b16 %v60
    %v142 = vunpack.c.l.b16 %v61
    %v143 = vunpack.c.l.b16 %v62
    %v144 = vunpack.c.l.b16 %v63
    %v145 = vunpack.c.l.b16 %v64
    %v146 = vunpack.c.l.b16 %v65
    %v147 = vunpack.c.l.b16 %v66
    %v148 = vunpack.c.l.b16 %v67
    %v149 = vunpack.c.l.b16 %v68
    %v150 = vunpack.c.l.b16 %v69
    %v151 = vunpack.c.l.b16 %v70
    %v152 = vunpack.c.l.b16 %v71
    %v153 = vunpack.c.l.b16 %v72
    %v154 = vunpack.c.l.b16 %v73
    %v155 = vunpack.c.l.b16 %v74
    %v156 = vunpack.c.l.b16 %v75
    %v157 = vunpack.c.l.b16 %v76
    %v158 = vunpack.c.l.b16 %v77
    %v159 = vunpack.c.l.b16 %v78
    %v160 = vunpack.c.l.b16 %v79
    %v161 = vunpack.c.l.b16 %v80
    %v162 = vunpack.c.l.b16 %v81
    %v163 = vunpack.c.l.b16 %v82
    %v164 = vpack.c.b16 %v133, %v132
    %v165 = vpack.c.b16 %v135, %v134
    %v166 = vpack.c.b16 %v137, %v136
    %v167 = vpack.c.b16 %v139, %v138
    %v168 = vpack.c.b16 %v141, %v140
    %v169 = vpack.c.b16 %v143, %v142
    %v170 = vpack.c.b16 %v145, %v144
    %v171 = vpack.c.b16 %v147, %v146
    %v172 = vpack.c.b16 %v149, %v148
    %v173 = vpack.c.b16 %v151, %v150
    %v174 = vpack.c.b16 %v153, %v152
    %v175 = vpack.c.b16 %v155, %v154
    %v176 = vpack.c.b16 %v157, %v156
    %v177 = vpack.c.b16 %v159, %v158
    %v178 = vpack.c.b16 %v161, %v160
    %v179 = vpack.c.b16 %v163, %v162
    %196 = vmatprep.subr.bf16.mxu0 0
    %197 = vmatpush1.bf16.msra.mxu0 %v171
    %198 = vmatprep.subr.bf16.mxu0 0
    %199 = vmatpush1.bf16.msra.mxu0 %v170
    %200 = vmatprep.subr.bf16.mxu0 0
    %201 = vmatpush1.bf16.msra.mxu0 %v169
    %202 = vmatprep.subr.bf16.mxu0 0
    %203 = vmatpush1.bf16.msra.mxu0 %v168
    %204 = vmatprep.subr.bf16.mxu0 0
    %205 = vmatpush1.bf16.msra.mxu0 %v167
    %206 = vmatprep.subr.bf16.mxu0 0
    %207 = vmatpush1.bf16.msra.mxu0 %v166
    %208 = vmatprep.subr.bf16.mxu0 0
    %209 = vmatpush1.bf16.msra.mxu0 %v165
    %210 = vmatprep.subr.bf16.mxu0 0
    %211 = vmatpush1.bf16.msra.mxu0 %v164
    %212 = vmatprep.subr.bf16.mxu0 0
    %213 = vmatpush2.bf16.msra.mxu0 %v179
    %214 = vmatprep.subr.bf16.mxu0 0
    %215 = vmatpush2.bf16.msra.mxu0 %v178
    %216 = vmatprep.subr.bf16.mxu0 0
    %217 = vmatpush2.bf16.msra.mxu0 %v177
    %218 = vmatprep.subr.bf16.mxu0 0
    %219 = vmatpush2.bf16.msra.mxu0 %v176
    %220 = vmatprep.subr.bf16.mxu0 0
    %221 = vmatpush2.bf16.msra.mxu0 %v175
    %222 = vmatprep.subr.bf16.mxu0 0
    %223 = vmatpush2.bf16.msra.mxu0 %v174
    %224 = vmatprep.subr.bf16.mxu0 0
    %225 = vmatpush2.bf16.msra.mxu0 %v173
    %226 = vmatprep.subr.bf16.mxu0 0
    %227 = vmatpush2.bf16.msra.mxu0 %v172
    %228 = vmatprep.mubr.bf16.mxu0 %v97
    %229 = vmatmul.mubr.bf16.gmra.mxu0 %v96
    %v230 = vpop.f32.mrf.mxu0
    %v231 = vadd.f32 %v88, %v230
    %v232 = vpop.f32.mrf.mxu0
    %v233 = vpop.f32.mrf.mxu0
    %v234 = vadd.f32 %v88, %v233
    %v235 = vpop.f32.mrf.mxu0
    %236 = vdwg.mxu0
    %v237 = vmax.f32 %v231, 0.0
    %v238 = vmax.f32 %v234, 0.0
    %v239 = vld [vmem:[#allocation2] sm:$0x3]
    %v240 = vrot.slane %v237, 4
    %v241 = vadd.f32 %v237, %v240
    %v242 = vrot.slane %v241, 2
    %v243 = vadd.f32 %v241, %v242
    %v244 = vrot.slane %v243, 1
    %v245 = vadd.f32 %v243, %v244
    %v246 = vrot.slane %v238, 4
    %v247 = vadd.f32 %v238, %v246
    %v248 = vrot.slane %v247, 2
    %v249 = vadd.f32 %v247, %v248
    %v250 = vrot.slane %v249, 1
    %v251 = vadd.f32 %v249, %v250
    %vm254 = vcmask 1041409
    %v255 = vsel %vm254, %v251, %v245
    %v257 = vadd.f32 %v239, %v255
    %258 = vst [vmem:[#allocation2] sm:$0x3] %v257
    // Predicated region
    $region26: #{tpu_custom_call.1} parent=1 // pred_check
      %p259 = pneg %p44
    $region27: #{tpu_custom_call.1} parent=1 // pred_check_branch
      %261 = sbr.rel (%p259) target = $region29
    $region28: #{tpu_custom_call.1} parent=1 // pred_region
      %v262 = vld [vmem:[#allocation2] sm:$0x3]
      %v263 = vmul.f32 %v262, 0.125
      %264 = vst [vmem:[#allocation8] sm:$0x3] %v263
    $region29: #{tpu_custom_call.1} parent=1 // pred_fallthru
      _
    // Predicated region
    $region30: #{tpu_custom_call.1} parent=1 // pred_check
      _
    $region31: #{tpu_custom_call.1} parent=1 // pred_check_branch
      %266 = sbr.rel (0) target = $region33
    $region32: #{tpu_custom_call.1} parent=1 // pred_region
      %s268 = ssub.s32 32, 32
      %269 = vsyncadd [#allocation5], %s268
      %s271 = sshll.u32 [#allocation8], 4
      %s272 = int_to_ptr.vmem [resolvable:$true] %s271
      %274 = dma.vmem_to_hbm [thread:$0]  %s272, 32, %s3, [#allocation5]
    $region33: #{tpu_custom_call.1} parent=1 // pred_fallthru
      _
    // Predicated region
    $region34: #{tpu_custom_call.1} parent=1 // pred_check
      _
    $region35: #{tpu_custom_call.1} parent=1 // pred_check_branch
      %276 = sbr.rel (0) target = $region37
    $region36: #{tpu_custom_call.1} parent=1 // pred_region
      %277 = dma.done [#allocation5], 32
    $region37: #{tpu_custom_call.1} parent=1 // pred_fallthru
      _
    %278 = vsyncpa [#allocation4], 1
    %279 = vsyncpa [#allocation7], 1
    %280 = vsyncpa [#allocation5], 1

</llo_original>
